<compile_context>
chip_gen: v5e
topology: v5e:2x2
jax: 0.10.0
libtpu: 0.0.40
codegen_flags: <defaults>
</compile_context>

<pallas_src>
import jax
import jax.numpy as jnp
from jax.experimental import pallas as pl
from jax.experimental.pallas import tpu as pltpu


def _round_up(x, m):
    return (x + m - 1) // m * m


def _slab_layout(f, d):
    """Offsets/widths of each logical output inside the packed output slab."""
    fields = [
        ("features", d),
        ("latent_audio", f), ("latent_video", f),
        ("reconstructed_audio", f), ("reconstructed_video", f),
        ("mu_audio", f), ("log_sigma_audio", f),
        ("mu_video", f), ("log_sigma_video", f),
    ]
    layout, off = {}, 0
    for name, w in fields:
        layout[name] = (off, w)
        off += w
    return layout, off


# ----------------------------------------------------------------------------
# Generation-aware defaults (tile rows / scoped VMEM) and a one-time probe for
# single-buffered (Buffered(1)) weight BlockSpecs.
# ----------------------------------------------------------------------------

def _default_config():
    try:
        info = pltpu.get_tpu_info()
        vmem = int(getattr(info, "vmem_capacity_bytes", 64 * 1024 * 1024))
    except Exception:
        vmem = 64 * 1024 * 1024
    if vmem >= 100 * 1024 * 1024:
        # v5e / v6e: 128 MiB physical VMEM -> big row tiles, big scoped limit.
        return 512, 96 * 1024 * 1024
    # v7x: 64 MiB per TensorCore -> 256-row tiles within a 48 MiB budget.
    return 256, 48 * 1024 * 1024


_BUFFERED_WEIGHTS_OK = None


def _buffered_weights_supported():
    """Probe pipeline_mode=pl.Buffered(1) once with a trivial kernel."""
    global _BUFFERED_WEIGHTS_OK
    if _BUFFERED_WEIGHTS_OK is None:
        def k(w_ref, o_ref):
            o_ref[...] = w_ref[...] * 2.0
        try:
            out = pl.pallas_call(
                k,
                out_shape=jax.ShapeDtypeStruct((8, 128), jnp.float32),
                grid=(2,),
                in_specs=[pl.BlockSpec((8, 128), lambda i: (0, 0),
                                       pipeline_mode=pl.Buffered(buffer_count=1))],
                out_specs=pl.BlockSpec((8, 128), lambda i: (0, 0)),
            )(jnp.ones((8, 128), jnp.float32))
            jax.block_until_ready(out)
            _BUFFERED_WEIGHTS_OK = True
        except Exception:
            # Probe kernel is trivial: any failure here means Buffered(1) is
            # not usable on this JAX/Mosaic build.
            _BUFFERED_WEIGHTS_OK = False
    return _BUFFERED_WEIGHTS_OK


def _choose_tile(rows, tile_rows):
    """Row tile: big (fills MXU M), divides rows when possible, >=2 grid steps."""
    tile = max(8, min(_round_up(tile_rows, 8), _round_up(rows, 8)))
    # Prefer a tile that divides rows exactly (skips the jnp.pad host copy).
    if rows % tile != 0 and rows % 8 == 0:
        t = (min(tile, rows) // 8) * 8
        while t >= 8 and rows % t != 0:
            t -= 8
        if t >= max(8, tile // 2) and rows % t == 0:
            tile = t
    rows_p = _round_up(rows, tile)
    # v7x has 2 TensorCores and the grid axis is "parallel": keep >= 2 steps.
    if rows_p // tile < 2 and rows_p >= 16:
        tile = max(8, (rows_p // 2) // 8 * 8)
        rows_p = _round_up(rows, tile)
    return tile, rows_p


# ----------------------------------------------------------------------------
# Kernel
# ----------------------------------------------------------------------------

def _make_kernel(f, layout, direct_store):
    """Kernel factory: f (per-modality width), slab layout, store strategy."""

    def kernel(x_ref,
               w_ib_a_ref, b_ib_a_ref, w_ib_v_ref, b_ib_v_ref,
               w_s2_a_ref, b_dec_a_ref, w_s2_v_ref, b_dec_v_ref, b_proj_ref,
               out_ref):
        cdt = w_ib_a_ref.dtype          # compute (MXU operand) dtype, e.g. bf16
        odt = out_ref.dtype

        x = x_ref[...]
        # In-kernel modality split + cast (lane-aligned static slice when
        # F % 128 == 0; still correct otherwise).
        a = x[:, :f].astype(cdt)
        v = x[:, f:].astype(cdt)

        # Stage 1: fused (mu | log_sigma) projection, f32 accumulation.
        ib_a = jnp.dot(a, w_ib_a_ref[...],
                       preferred_element_type=jnp.float32) + b_ib_a_ref[...]
        ib_v = jnp.dot(v, w_ib_v_ref[...],
                       preferred_element_type=jnp.float32) + b_ib_v_ref[...]

        # Deterministic latent = tanh(mu)  (ib_activation='tanh', eval mode).
        lat_a = jnp.tanh(ib_a[:, :f])
        lat_v = jnp.tanh(ib_v[:, :f])

        # Stage 2 fused per modality: [rec | proj-contribution] in one matmul.
        s2_a = jnp.dot(lat_a.astype(cdt), w_s2_a_ref[...],
                       preferred_element_type=jnp.float32)
        s2_v = jnp.dot(lat_v.astype(cdt), w_s2_v_ref[...],
                       preferred_element_type=jnp.float32)
        rec_a = s2_a[:, :f] + b_dec_a_ref[...]
        rec_v = s2_v[:, :f] + b_dec_v_ref[...]
        feat = s2_a[:, f:] + s2_v[:, f:] + b_proj_ref[...]

        if direct_store:
            # 128-aligned offsets/widths -> unmasked lane-dense stores, no
            # concat temp in VMEM.
            def put(name, width, val):
                off = layout[name][0]
                out_ref[:, off:off + width] = val.astype(odt)

            d = layout["features"][1]
            put("features", d, feat)
            put("latent_audio", f, lat_a)
            put("latent_video", f, lat_v)
            put("reconstructed_audio", f, rec_a)
            put("reconstructed_video", f, rec_v)
            put("mu_audio", 2 * f, ib_a)    # mu_audio | log_sigma_audio contiguous
            put("mu_video", 2 * f, ib_v)    # mu_video | log_sigma_video contiguous
        else:
            # Fallback for F/D not multiples of 128: one full-width store.
            slab = jnp.concatenate(
                [feat, lat_a, lat_v, rec_a, rec_v, ib_a, ib_v], axis=-1)
            out_ref[...] = slab.astype(odt)

    return kernel


# ----------------------------------------------------------------------------
# Wrapper
# ----------------------------------------------------------------------------

def pack_params(params, compute_dtype=jnp.bfloat16):
    """One-time weight repacking (hoisted out of the per-forward path):
       - [W_mu | W_log_sigma] fused per modality  (stage-1 matmul)
       - [W_dec | W_proj_modality] fused per modality (stage-2 matmul)
       - operands cast to the MXU compute dtype, biases kept f32."""
    f = params["w_mu_a"].shape[0]
    d = params["w_proj"].shape[1]
    cw = lambda w: jnp.asarray(w, compute_dtype)
    cb = lambda b: jnp.asarray(b, jnp.float32).reshape(1, -1)
    return {
        "f": f, "d": d,
        "w_ib_a": cw(jnp.concatenate([params["w_mu_a"], params["w_ls_a"]], axis=1)),
        "b_ib_a": cb(jnp.concatenate([params["b_mu_a"], params["b_ls_a"]], axis=-1)),
        "w_ib_v": cw(jnp.concatenate([params["w_mu_v"], params["w_ls_v"]], axis=1)),
        "b_ib_v": cb(jnp.concatenate([params["b_mu_v"], params["b_ls_v"]], axis=-1)),
        "w_s2_a": cw(jnp.concatenate([params["w_dec_a"], params["w_proj"][:f]], axis=1)),
        "b_dec_a": cb(params["b_dec_a"]),
        "w_s2_v": cw(jnp.concatenate([params["w_dec_v"], params["w_proj"][f:]], axis=1)),
        "b_dec_v": cb(params["b_dec_v"]),
        "b_proj": cb(params["b_proj"]),
    }


def privacy_module_wrapper_forward(
    x, packed, *,
    tile_rows=None,                # None -> generation default (512 v5e/v6e, 256 v7x)
    out_dtype=jnp.bfloat16,        # kernel writes D+8F per row vs reads 2F ->
                                   # bf16 slab halves the store/HBM-writeback cost;
                                   # pass jnp.float32 if downstream needs full precision
    vmem_limit_bytes=None,         # None -> 96 MiB (v5e/v6e) or 48 MiB (v7x)
    single_buffer_weights=True,
):
    """x: [B, S, 2*F] concatenated (audio | video) features.
       packed: output of pack_params()."""
    B, S, two_f = x.shape
    f, d = packed["f"], packed["d"]
    assert two_f == 2 * f
    rows = B * S

    t_def, v_def = _default_config()
    tile_rows = t_def if tile_rows is None else tile_rows
    vmem_limit_bytes = v_def if vmem_limit_bytes is None else vmem_limit_bytes

    x2d = x.reshape(rows, two_f)
    tile, rows_p = _choose_tile(rows, tile_rows)
    if rows_p != rows:
        x2d = jnp.pad(x2d, ((0, rows_p - rows), (0, 0)))

    layout, slab_w = _slab_layout(f, d)
    direct_store = (f % 128 == 0) and (d % 128 == 0)
    kernel = _make_kernel(f, layout, direct_store)

    weights = [packed[k] for k in ("w_ib_a", "b_ib_a", "w_ib_v", "b_ib_v",
                                   "w_s2_a", "b_dec_a", "w_s2_v", "b_dec_v",
                                   "b_proj")]

    use_buffered = single_buffer_weights and _buffered_weights_supported()

    def wspec(shape):
        if use_buffered:
            # Weights never change across the grid: single-buffer them so the
            # saved VMEM can go to larger row tiles.
            return pl.BlockSpec(shape, lambda i: (0, 0),
                                pipeline_mode=pl.Buffered(buffer_count=1))
        return pl.BlockSpec(shape, lambda i: (0, 0))

    grid = (rows_p // tile,)
    slab = pl.pallas_call(
        kernel,
        out_shape=jax.ShapeDtypeStruct((rows_p, slab_w), out_dtype),
        grid_spec=pltpu.PrefetchScalarGridSpec(
            num_scalar_prefetch=0,
            grid=grid,
            in_specs=[pl.BlockSpec((tile, two_f), lambda i: (i, 0))]
                     + [wspec(w.shape) for w in weights],
            out_specs=pl.BlockSpec((tile, slab_w), lambda i: (i, 0)),
        ),
        compiler_params=pltpu.CompilerParams(
            dimension_semantics=("parallel",),
            vmem_limit_bytes=vmem_limit_bytes,
        ),
    )(x2d, *weights)

    slab = slab[:rows]
    out = {name: slab[:, off:off + w].reshape(B, S, w)
           for name, (off, w) in layout.items()}
    # The PrivacyModule returns the (unchanged) split inputs as
    # audio_features / video_features.
    out["audio_features"] = x[:, :, :f]
    out["video_features"] = x[:, :, f:]
    return out


# ----------------------------------------------------------------------------
# Plain-JAX reference mirroring the kernel numerics (bf16 operands, f32 acc).
# ----------------------------------------------------------------------------

def _reference(x, params, compute_dtype=jnp.bfloat16):
    f = x.shape[-1] // 2
    dot = lambda p, q: jnp.dot(p, q.astype(compute_dtype),
                               preferred_element_type=jnp.float32)
    a = x[..., :f].astype(compute_dtype)
    v = x[..., f:].astype(compute_dtype)

    mu_a = dot(a, params["w_mu_a"]) + params["b_mu_a"]
    ls_a = dot(a, params["w_ls_a"]) + params["b_ls_a"]
    lat_a = jnp.tanh(mu_a)
    rec_a = dot(lat_a.astype(compute_dtype), params["w_dec_a"]) + params["b_dec_a"]

    mu_v = dot(v, params["w_mu_v"]) + params["b_mu_v"]
    ls_v = dot(v, params["w_ls_v"]) + params["b_ls_v"]
    lat_v = jnp.tanh(mu_v)
    rec_v = dot(lat_v.astype(compute_dtype), params["w_dec_v"]) + params["b_dec_v"]

    feat = (dot(lat_a.astype(compute_dtype), params["w_proj"][:f])
            + dot(lat_v.astype(compute_dtype), params["w_proj"][f:])
            + params["b_proj"])
    return {
        "features": feat, "latent_audio": lat_a, "latent_video": lat_v,
        "reconstructed_audio": rec_a, "reconstructed_video": rec_v,
        "mu_audio": mu_a, "log_sigma_audio": ls_a,
        "mu_video": mu_v, "log_sigma_video": ls_v,
        "audio_features": x[..., :f], "video_features": x[..., f:],
    }


def _init_params(key, f, d):
    ks = jax.random.split(key, 14)

    def lin(k, fan_in, fan_out):
        s = 1.0 / jnp.sqrt(fan_in)
        return jax.random.uniform(k, (fan_in, fan_out), jnp.float32, -s, s)

    def bias(k, n):
        return jax.random.uniform(k, (1, n), jnp.float32, -0.1, 0.1)

    p = {}
    p["w_mu_a"] = lin(ks[0], f, f);   p["b_mu_a"] = bias(ks[1], f)
    p["w_ls_a"] = lin(ks[2], f, f);   p["b_ls_a"] = bias(ks[3], f)
    p["w_dec_a"] = lin(ks[4], f, f);  p["b_dec_a"] = bias(ks[5], f)
    p["w_mu_v"] = lin(ks[6], f, f);   p["b_mu_v"] = bias(ks[7], f)
    p["w_ls_v"] = lin(ks[8], f, f);   p["b_ls_v"] = bias(ks[9], f)
    p["w_dec_v"] = lin(ks[10], f, f); p["b_dec_v"] = bias(ks[11], f)
    p["w_proj"] = lin(ks[12], 2 * f, d)
    p["b_proj"] = bias(ks[13], d)
    return p


def _check(out, ref, atol, rtol):
    for name, r in ref.items():
        got = out[name].astype(jnp.float32)
        assert jnp.allclose(got, r, atol=atol, rtol=rtol), name


if __name__ == "__main__":
    key = jax.random.PRNGKey(0)
    kx, kp, kx2, kx3, kp3 = jax.random.split(key, 5)

    # ---- Test 1: small shapes (B=2, S=8, F=32, D=64), concat fallback path,
    #              grid forced to >= 2 steps, strict f32-output check.
    B, S, F, D = 2, 8, 32, 64
    x = jax.random.normal(kx, (B, S, 2 * F), jnp.float32)
    params = _init_params(kp, F, D)
    packed = pack_params(params)                       # hoisted weight repack

    out = privacy_module_wrapper_forward(x, packed, out_dtype=jnp.float32)
    jax.block_until_ready(out)
    _check(out, _reference(x, params), atol=1e-4, rtol=1e-4)

    # ---- Test 2: rows=400 exercises divisor tiling / multi-step parallel grid.
    x2 = jax.random.normal(kx2, (2, 200, 2 * F), jnp.float32)
    out2 = privacy_module_wrapper_forward(x2, packed, out_dtype=jnp.float32)
    jax.block_until_ready(out2)
    _check(out2, _reference(x2, params), atol=1e-4, rtol=1e-4)

    # ---- Test 3: F=D=128 exercises the 128-aligned direct-store path.
    F3, D3 = 128, 128
    x3 = jax.random.normal(kx3, (2, 8, 2 * F3), jnp.float32)
    params3 = _init_params(kp3, F3, D3)
    packed3 = pack_params(params3)
    out3 = privacy_module_wrapper_forward(x3, packed3, out_dtype=jnp.float32)
    jax.block_until_ready(out3)
    _check(out3, _reference(x3, params3), atol=1e-4, rtol=1e-4)

    # ---- Test 4: default bf16 output slab (store-bandwidth optimized path),
    #              looser tolerance for the bf16 round-trip.
    out4 = privacy_module_wrapper_forward(x, packed)   # out_dtype=bf16 default
    jax.block_until_ready(out4)
    _check(out4, _reference(x, params), atol=5e-2, rtol=5e-2)

    print("KERNEL_OK")
</pallas_src>

<mosaic_0001>
module attributes {stable_mosaic.version = 11 : i64} {
  func.func @k(%arg0: i32, %arg1: memref<8x128xf32, #tpu.memory_space<vmem>>, %arg2: memref<8x128xf32, #tpu.memory_space<vmem>>) attributes {dimension_semantics = [#tpu.dimension_semantics<arbitrary>], iteration_bounds = array<i64: 2>, scalar_prefetch = 0 : i64, scratch_operands = 0 : i64, tpu.core_type = #tpu.core_type<tc>, window_params = [{pipeline_mode = #tpu.pipeline_mode<synchronous>, transform_indices = @transform_0, window_bounds = array<i64: 8, 128>}, {pipeline_mode = #tpu.pipeline_mode<synchronous>, transform_indices = @transform_1, window_bounds = array<i64: 8, 128>}]} {
    %c0 = arith.constant 0 : index
    %c0_0 = arith.constant 0 : index
    %0 = vector.load %arg1[%c0, %c0_0] : memref<8x128xf32, #tpu.memory_space<vmem>>, vector<8x128xf32>
    %cst = arith.constant 2.000000e+00 : f32
    %1 = vector.broadcast %cst : f32 to vector<8x128xf32>
    %2 = arith.mulf %0, %1 : vector<8x128xf32>
    %c0_1 = arith.constant 0 : index
    %c0_2 = arith.constant 0 : index
    %3 = vector.load %arg2[%c0_1, %c0_2] : memref<8x128xf32, #tpu.memory_space<vmem>>, vector<8x128xf32>
    tpu.vector_store %arg2[%c0_1, %c0_2], %2 {strides = array<i32>} : memref<8x128xf32, #tpu.memory_space<vmem>>, vector<8x128xf32>,
    return
  }
  func.func @transform_0(%arg0: i32) -> (i32, i32) {
    %c0_i32 = arith.constant 0 : i32
    %c0_i32_0 = arith.constant 0 : i32
    %c0_i32_1 = arith.constant 0 : i32
    return %c0_i32, %c0_i32_0 : i32, i32
  }
  func.func @transform_1(%arg0: i32) -> (i32, i32) {
    %c0_i32 = arith.constant 0 : i32
    %c0_i32_0 = arith.constant 0 : i32
    %c0_i32_1 = arith.constant 0 : i32
    return %c0_i32, %c0_i32_0 : i32, i32
  }
}

module attributes {stable_mosaic.version = 11 : i64} {
  func.func @kernel(%arg0: i32, %arg1: memref<8x64xf32, #tpu.memory_space<vmem>>, %arg2: memref<32x64xbf16, #tpu.memory_space<vmem>>, %arg3: memref<1x64xf32, #tpu.memory_space<vmem>>, %arg4: memref<32x64xbf16, #tpu.memory_space<vmem>>, %arg5: memref<1x64xf32, #tpu.memory_space<vmem>>, %arg6: memref<32x96xbf16, #tpu.memory_space<vmem>>, %arg7: memref<1x32xf32, #tpu.memory_space<vmem>>, %arg8: memref<32x96xbf16, #tpu.memory_space<vmem>>, %arg9: memref<1x32xf32, #tpu.memory_space<vmem>>, %arg10: memref<1x64xf32, #tpu.memory_space<vmem>>, %arg11: memref<8x320xf32, #tpu.memory_space<vmem>>) attributes {dimension_semantics = [#tpu.dimension_semantics<parallel>], iteration_bounds = array<i64: 2>, scalar_prefetch = 0 : i64, scratch_operands = 0 : i64, tpu.core_type = #tpu.core_type<tc>, window_params = [{transform_indices = @transform_0, window_bounds = array<i64: 8, 64>}, {pipeline_mode = #tpu.pipeline_mode<synchronous>, transform_indices = @transform_1, window_bounds = array<i64: 32, 64>}, {pipeline_mode = #tpu.pipeline_mode<synchronous>, transform_indices = @transform_2, window_bounds = array<i64: 1, 64>}, {pipeline_mode = #tpu.pipeline_mode<synchronous>, transform_indices = @transform_3, window_bounds = array<i64: 32, 64>}, {pipeline_mode = #tpu.pipeline_mode<synchronous>, transform_indices = @transform_4, window_bounds = array<i64: 1, 64>}, {pipeline_mode = #tpu.pipeline_mode<synchronous>, transform_indices = @transform_5, window_bounds = array<i64: 32, 96>}, {pipeline_mode = #tpu.pipeline_mode<synchronous>, transform_indices = @transform_6, window_bounds = array<i64: 1, 32>}, {pipeline_mode = #tpu.pipeline_mode<synchronous>, transform_indices = @transform_7, window_bounds = array<i64: 32, 96>}, {pipeline_mode = #tpu.pipeline_mode<synchronous>, transform_indices = @transform_8, window_bounds = array<i64: 1, 32>}, {pipeline_mode = #tpu.pipeline_mode<synchronous>, transform_indices = @transform_9, window_bounds = array<i64: 1, 64>}, {transform_indices = @transform_10, window_bounds = array<i64: 8, 320>}]} {
    %c0 = arith.constant 0 : index
    %c0_0 = arith.constant 0 : index
    %0 = vector.load %arg1[%c0, %c0_0] : memref<8x64xf32, #tpu.memory_space<vmem>>, vector<8x64xf32>
    %1 = vector.extract_strided_slice %0 {offsets = [0, 0], sizes = [8, 32], strides = [1, 1]} : vector<8x64xf32> to vector<8x32xf32>
    %2 = arith.truncf %1 : vector<8x32xf32> to vector<8x32xbf16>
    %3 = vector.extract_strided_slice %0 {offsets = [0, 32], sizes = [8, 32], strides = [1, 1]} : vector<8x64xf32> to vector<8x32xf32>
    %4 = arith.truncf %3 : vector<8x32xf32> to vector<8x32xbf16>
    %c0_1 = arith.constant 0 : index
    %c0_2 = arith.constant 0 : index
    %5 = vector.load %arg2[%c0_1, %c0_2] : memref<32x64xbf16, #tpu.memory_space<vmem>>, vector<32x64xbf16>
    %cst = arith.constant dense<0.000000e+00> : vector<8x64xf32>
    %6 = tpu.matmul %2, %5, %cst {dimension_numbers = #tpu.dot_dimension_numbers<[1], [0], [0], [1], [0, 0, 1, 1], [], []>} : vector<8x32xbf16>, vector<32x64xbf16>, vector<8x64xf32> -> vector<8x64xf32>
    %c0_3 = arith.constant 0 : index
    %c0_4 = arith.constant 0 : index
    %7 = vector.load %arg3[%c0_3, %c0_4] : memref<1x64xf32, #tpu.memory_space<vmem>>, vector<1x64xf32>
    %8 = vector.broadcast %7 : vector<1x64xf32> to vector<8x64xf32>
    %9 = arith.addf %6, %8 : vector<8x64xf32>
    %c0_5 = arith.constant 0 : index
    %c0_6 = arith.constant 0 : index
    %10 = vector.load %arg4[%c0_5, %c0_6] : memref<32x64xbf16, #tpu.memory_space<vmem>>, vector<32x64xbf16>
    %cst_7 = arith.constant dense<0.000000e+00> : vector<8x64xf32>
    %11 = tpu.matmul %4, %10, %cst_7 {dimension_numbers = #tpu.dot_dimension_numbers<[1], [0], [0], [1], [0, 0, 1, 1], [], []>} : vector<8x32xbf16>, vector<32x64xbf16>, vector<8x64xf32> -> vector<8x64xf32>
    %c0_8 = arith.constant 0 : index
    %c0_9 = arith.constant 0 : index
    %12 = vector.load %arg5[%c0_8, %c0_9] : memref<1x64xf32, #tpu.memory_space<vmem>>, vector<1x64xf32>
    %13 = vector.broadcast %12 : vector<1x64xf32> to vector<8x64xf32>
    %14 = arith.addf %11, %13 : vector<8x64xf32>
    %15 = vector.extract_strided_slice %9 {offsets = [0, 0], sizes = [8, 32], strides = [1, 1]} : vector<8x64xf32> to vector<8x32xf32>
    %16 = math.tanh %15 : vector<8x32xf32>
    %17 = vector.extract_strided_slice %14 {offsets = [0, 0], sizes = [8, 32], strides = [1, 1]} : vector<8x64xf32> to vector<8x32xf32>
    %18 = math.tanh %17 : vector<8x32xf32>
    %19 = arith.truncf %16 : vector<8x32xf32> to vector<8x32xbf16>
    %c0_10 = arith.constant 0 : index
    %c0_11 = arith.constant 0 : index
    %20 = vector.load %arg6[%c0_10, %c0_11] : memref<32x96xbf16, #tpu.memory_space<vmem>>, vector<32x96xbf16>
    %cst_12 = arith.constant dense<0.000000e+00> : vector<8x96xf32>
    %21 = tpu.matmul %19, %20, %cst_12 {dimension_numbers = #tpu.dot_dimension_numbers<[1], [0], [0], [1], [0, 0, 1, 1], [], []>} : vector<8x32xbf16>, vector<32x96xbf16>, vector<8x96xf32> -> vector<8x96xf32>
    %22 = arith.truncf %18 : vector<8x32xf32> to vector<8x32xbf16>
    %c0_13 = arith.constant 0 : index
    %c0_14 = arith.constant 0 : index
    %23 = vector.load %arg8[%c0_13, %c0_14] : memref<32x96xbf16, #tpu.memory_space<vmem>>, vector<32x96xbf16>
    %cst_15 = arith.constant dense<0.000000e+00> : vector<8x96xf32>
    %24 = tpu.matmul %22, %23, %cst_15 {dimension_numbers = #tpu.dot_dimension_numbers<[1], [0], [0], [1], [0, 0, 1, 1], [], []>} : vector<8x32xbf16>, vector<32x96xbf16>, vector<8x96xf32> -> vector<8x96xf32>
    %25 = vector.extract_strided_slice %21 {offsets = [0, 0], sizes = [8, 32], strides = [1, 1]} : vector<8x96xf32> to vector<8x32xf32>
    %c0_16 = arith.constant 0 : index
    %c0_17 = arith.constant 0 : index
    %26 = vector.load %arg7[%c0_16, %c0_17] : memref<1x32xf32, #tpu.memory_space<vmem>>, vector<1x32xf32>
    %27 = vector.broadcast %26 : vector<1x32xf32> to vector<8x32xf32>
    %28 = arith.addf %25, %27 : vector<8x32xf32>
    %29 = vector.extract_strided_slice %24 {offsets = [0, 0], sizes = [8, 32], strides = [1, 1]} : vector<8x96xf32> to vector<8x32xf32>
    %c0_18 = arith.constant 0 : index
    %c0_19 = arith.constant 0 : index
    %30 = vector.load %arg9[%c0_18, %c0_19] : memref<1x32xf32, #tpu.memory_space<vmem>>, vector<1x32xf32>
    %31 = vector.broadcast %30 : vector<1x32xf32> to vector<8x32xf32>
    %32 = arith.addf %29, %31 : vector<8x32xf32>
    %33 = vector.extract_strided_slice %21 {offsets = [0, 32], sizes = [8, 64], strides = [1, 1]} : vector<8x96xf32> to vector<8x64xf32>
    %34 = vector.extract_strided_slice %24 {offsets = [0, 32], sizes = [8, 64], strides = [1, 1]} : vector<8x96xf32> to vector<8x64xf32>
    %35 = arith.addf %33, %34 : vector<8x64xf32>
    %c0_20 = arith.constant 0 : index
    %c0_21 = arith.constant 0 : index
    %36 = vector.load %arg10[%c0_20, %c0_21] : memref<1x64xf32, #tpu.memory_space<vmem>>, vector<1x64xf32>
    %37 = vector.broadcast %36 : vector<1x64xf32> to vector<8x64xf32>
    %38 = arith.addf %35, %37 : vector<8x64xf32>
    %39 = tpu.concatenate %38, %16, %18, %28, %32, %9, %14 in 1 : vector<8x64xf32>, vector<8x32xf32>, vector<8x32xf32>, vector<8x32xf32>, vector<8x32xf32>, vector<8x64xf32>, vector<8x64xf32> -> vector<8x320xf32>
    %c0_22 = arith.constant 0 : index
    %c0_23 = arith.constant 0 : index
    %40 = vector.load %arg11[%c0_22, %c0_23] : memref<8x320xf32, #tpu.memory_space<vmem>>, vector<8x320xf32>
    tpu.vector_store %arg11[%c0_22, %c0_23], %39 {strides = array<i32>} : memref<8x320xf32, #tpu.memory_space<vmem>>, vector<8x320xf32>,
    return
  }
  func.func @transform_0(%arg0: i32) -> (i32, i32) {
    %c0_i32 = arith.constant 0 : i32
    %c0_i32_0 = arith.constant 0 : i32
    return %arg0, %c0_i32 : i32, i32
  }
  func.func @transform_1(%arg0: i32) -> (i32, i32) {
    %c0_i32 = arith.constant 0 : i32
    %c0_i32_0 = arith.constant 0 : i32
    %c0_i32_1 = arith.constant 0 : i32
    return %c0_i32, %c0_i32_0 : i32, i32
  }
  func.func @transform_2(%arg0: i32) -> (i32, i32) {
    %c0_i32 = arith.constant 0 : i32
    %c0_i32_0 = arith.constant 0 : i32
    %c0_i32_1 = arith.constant 0 : i32
    return %c0_i32, %c0_i32_0 : i32, i32
  }
  func.func @transform_3(%arg0: i32) -> (i32, i32) {
    %c0_i32 = arith.constant 0 : i32
    %c0_i32_0 = arith.constant 0 : i32
    %c0_i32_1 = arith.constant 0 : i32
    return %c0_i32, %c0_i32_0 : i32, i32
  }
  func.func @transform_4(%arg0: i32) -> (i32, i32) {
    %c0_i32 = arith.constant 0 : i32
    %c0_i32_0 = arith.constant 0 : i32
    %c0_i32_1 = arith.constant 0 : i32
    return %c0_i32, %c0_i32_0 : i32, i32
  }
  func.func @transform_5(%arg0: i32) -> (i32, i32) {
    %c0_i32 = arith.constant 0 : i32
    %c0_i32_0 = arith.constant 0 : i32
    %c0_i32_1 = arith.constant 0 : i32
    return %c0_i32, %c0_i32_0 : i32, i32
  }
  func.func @transform_6(%arg0: i32) -> (i32, i32) {
    %c0_i32 = arith.constant 0 : i32
    %c0_i32_0 = arith.constant 0 : i32
    %c0_i32_1 = arith.constant 0 : i32
    return %c0_i32, %c0_i32_0 : i32, i32
  }
  func.func @transform_7(%arg0: i32) -> (i32, i32) {
    %c0_i32 = arith.constant 0 : i32
    %c0_i32_0 = arith.constant 0 : i32
    %c0_i32_1 = arith.constant 0 : i32
    return %c0_i32, %c0_i32_0 : i32, i32
  }
  func.func @transform_8(%arg0: i32) -> (i32, i32) {
    %c0_i32 = arith.constant 0 : i32
    %c0_i32_0 = arith.constant 0 : i32
    %c0_i32_1 = arith.constant 0 : i32
    return %c0_i32, %c0_i32_0 : i32, i32
  }
  func.func @transform_9(%arg0: i32) -> (i32, i32) {
    %c0_i32 = arith.constant 0 : i32
    %c0_i32_0 = arith.constant 0 : i32
    %c0_i32_1 = arith.constant 0 : i32
    return %c0_i32, %c0_i32_0 : i32, i32
  }
  func.func @transform_10(%arg0: i32) -> (i32, i32) {
    %c0_i32 = arith.constant 0 : i32
    %c0_i32_0 = arith.constant 0 : i32
    return %arg0, %c0_i32 : i32, i32
  }
}

</mosaic_0001>

<llo_original>
// kernel: tpu_custom_call.1
$region0: #{tpu_custom_call.1}
  #allocation0 [shape = 'u32[]', space=smem, size = 0x4, offset = 0x4, fixed_abs, tag = 'smem constant byte address 0x4 - core index']
  #allocation1 [shape = 'u32[72,128]{1,0:T(1,128)}', space=vmem, size = 0x9000, scoped, tag = 'internal scratch']
  %s0 = inlined_call_operand.hbm [shape: f32[8,128], index: 0, kind: input, shape index: {}]
  %s1 = inlined_call_operand.hbm [shape: f32[8,128], index: 1, kind: output, shape index: {}]
  %s2 = sld [smem:[#allocation0]]
  $region41: #{tpu_custom_call.1} parent=0
    _
  %s4 = ssub.s32 1, %s2
  %s5 = scalar_select 0, %s4, %s2
  $region1: #{tpu_custom_call.1} parent=0
    #allocation2 [shape = 'u8[4096]{0}', space=vmem, size = 0x1000, scoped, tag = 'input window, operand 0, single buffered']
    #allocation3 [shape = 's32[2]{0}', space=sflag, size = 0x8, scoped, tag = 'scoped memory for tpu_custom_call.1']
    #allocation4 [shape = 's32[2]{0}', space=sflag, size = 0x8, scoped, tag = 'scoped memory for tpu_custom_call.1']
    #allocation5 [shape = 'u8[4096]{0}', space=vmem, size = 0x1000, scoped, tag = 'output window, operand 0, single buffered']
    %6 = vsyncpa [#allocation3], 0
    %7 = vsyncpa [#allocation4], 0
    loop: start=0, step=1, limit=4
    $region2: #{tpu_custom_call.1} parent=1 // loop_pre_header
      _
    $region3: #{tpu_custom_call.1} parent=1 // loop_header
      %s9 = sphi 0, %s13
      %p10 = scmp.ge.s32.totalorder %s9, 4
      %s17 = sphi 0, %s17
      %s19 = sphi 0, %s17
      %s20 = sphi 0, %s19
      %s34 = sphi 0, %s20
      %s38 = sphi 0, %s38
      %s40 = sphi 0, %s38
      %s41 = sphi 0, %s40
      %s55 = sphi 0, %s41
    $region4: #{tpu_custom_call.1} parent=1 // loop_header_branch
      %12 = sbr.rel (%p10) target = $region8
    $region5: #{tpu_custom_call.1} parent=1 // loop_body
      %s14 = ssub.s32 %s9, 1
      %s15 = ssub.s32 %s9, 2
      %s16 = sadd.s32 %s9, 1
      %s18 = sadd.s32 %s17, 1
      %p21 = scmp.eq.s32.totalorder %s9, 1
      %p22 = scmp.ne.s32.totalorder %s17, %s19
      %p23 = scmp.eq.s32.totalorder %s9, 0
      %p24 = por %p22, %p23
      %p25 = scmp.ne.s32.totalorder %s17, %s19
      %p26 = scmp.eq.s32.totalorder %s14, 1
      %p27 = por %p25, %p26
      %p28 = scmp.ne.s32.totalorder %s19, %s20
      %p29 = scmp.eq.s32.totalorder %s14, 0
      %p30 = por %p28, %p29
      %p31 = scmp.ne.s32.totalorder %s19, %s20
      %p32 = scmp.eq.s32.totalorder %s15, 1
      %p33 = por %p31, %p32
      %p35 = scmp.ne.s32.totalorder %s20, %s34
      %p36 = scmp.eq.s32.totalorder %s15, 0
      %p37 = por %p35, %p36
      %s39 = sadd.s32 %s38, 1
      %p42 = scmp.eq.s32.totalorder %s9, 1
      %p43 = scmp.ne.s32.totalorder %s38, %s40
      %p44 = scmp.eq.s32.totalorder %s9, 0
      %p45 = por %p43, %p44
      %p46 = scmp.ne.s32.totalorder %s38, %s40
      %p47 = scmp.eq.s32.totalorder %s14, 1
      %p48 = por %p46, %p47
      %p49 = scmp.ne.s32.totalorder %s40, %s41
      %p50 = scmp.eq.s32.totalorder %s14, 0
      %p51 = por %p49, %p50
      %p52 = scmp.ne.s32.totalorder %s40, %s41
      %p53 = scmp.eq.s32.totalorder %s15, 1
      %p54 = por %p52, %p53
      %p56 = scmp.ne.s32.totalorder %s41, %s55
      %p57 = scmp.eq.s32.totalorder %s15, 0
      %p58 = por %p56, %p57
      %p59 = scmp.le.s32.totalorder 1, %s9
      %p60 = scmp.lt.s32.totalorder %s9, 3
      %p61 = pnand %p59, %p60
      %p62 = pneg %p61
      // Predicated region
      $region9: #{tpu_custom_call.1} parent=5 // pred_check
        _
      $region10: #{tpu_custom_call.1} parent=5 // pred_check_branch
        %64 = sbr.rel (%p61) target = $region12
      $region11: #{tpu_custom_call.1} parent=5 // pred_region
        %s65 = ssub.s32 %s9, 1
        // Predicated region
        $region13: #{tpu_custom_call.1} parent=11 // pred_check
          %p66 = pneg %p30
        $region14: #{tpu_custom_call.1} parent=11 // pred_check_branch
          %68 = sbr.rel (%p66) target = $region16
        $region15: #{tpu_custom_call.1} parent=11 // pred_region
          %70 = vsyncadd [#allocation3], 0
          %s72 = sshll.u32 %s0, 4
          %s73 = int_to_ptr.hbm [resolvable:$true] %s72
          %s74 = sshll.u32 [#allocation2], 4
          %s75 = int_to_ptr.vmem [resolvable:$true] %s74
          %77 = dma.hbm_to_vmem [thread:$0]  %s73, 128, %s75, [#allocation3]
        $region16: #{tpu_custom_call.1} parent=11 // pred_fallthru
          _
      $region12: #{tpu_custom_call.1} parent=5 // pred_fallthru
        _
      %p78 = scmp.lt.s32.totalorder %s9, 2
      // Predicated region
      $region17: #{tpu_custom_call.1} parent=5 // pred_check
        %p79 = pneg %p78
      $region18: #{tpu_custom_call.1} parent=5 // pred_check_branch
        %81 = sbr.rel (%p79) target = $region20
      $region19: #{tpu_custom_call.1} parent=5 // pred_region
        _
      $region20: #{tpu_custom_call.1} parent=5 // pred_fallthru
        _
      %p82 = scmp.le.s32.totalorder 1, %s9
      %p83 = scmp.lt.s32.totalorder %s9, 3
      %p84 = pnand %p82, %p83
      %p85 = pneg %p84
      // Predicated region
      $region21: #{tpu_custom_call.1} parent=5 // pred_check
        _
      $region22: #{tpu_custom_call.1} parent=5 // pred_check_branch
        %87 = sbr.rel (%p84) target = $region24
      $region23: #{tpu_custom_call.1} parent=5 // pred_region
        %s88 = ssub.s32 %s9, 1
        // Predicated region
        $region25: #{tpu_custom_call.1} parent=23 // pred_check
          %p89 = pneg %p30
        $region26: #{tpu_custom_call.1} parent=23 // pred_check_branch
          %91 = sbr.rel (%p89) target = $region28
        $region27: #{tpu_custom_call.1} parent=23 // pred_region
          %93 = dma.done [#allocation3], 128
        $region28: #{tpu_custom_call.1} parent=23 // pred_fallthru
          _
        %p94 = pneg %p30
        %p95 = pneg %p27
        %p96 = pneg %p51
        %p97 = pneg %p48
        %v98 = vld [vmem:[#allocation2] sm:$0xff]
        %v99 = vmul.f32 %v98, 2.0
        %100 = vst [vmem:[#allocation5] sm:$0xff] %v99
        // Predicated region
        $region29: #{tpu_custom_call.1} parent=23 // pred_check
          %p101 = pneg %p48
        $region30: #{tpu_custom_call.1} parent=23 // pred_check_branch
          %103 = sbr.rel (%p101) target = $region32
        $region31: #{tpu_custom_call.1} parent=23 // pred_region
          %105 = vsyncadd [#allocation4], 0
          %s107 = sshll.u32 [#allocation5], 4
          %s108 = int_to_ptr.vmem [resolvable:$true] %s107
          %s109 = sshll.u32 %s1, 4
          %s110 = int_to_ptr.hbm [resolvable:$true] %s109
          %112 = dma.vmem_to_hbm [thread:$0]  %s108, 128, %s110, [#allocation4]
        $region32: #{tpu_custom_call.1} parent=23 // pred_fallthru
          _
        // Predicated region
        $region33: #{tpu_custom_call.1} parent=23 // pred_check
          %p113 = pneg %p48
        $region34: #{tpu_custom_call.1} parent=23 // pred_check_branch
          %115 = sbr.rel (%p113) target = $region36
        $region35: #{tpu_custom_call.1} parent=23 // pred_region
          %117 = dma.done [#allocation4], 128
        $region36: #{tpu_custom_call.1} parent=23 // pred_fallthru
          _
      $region24: #{tpu_custom_call.1} parent=5 // pred_fallthru
        _
      %p118 = scmp.le.s32.totalorder 2, %s9
      // Predicated region
      $region37: #{tpu_custom_call.1} parent=5 // pred_check
        %p119 = pneg %p118
      $region38: #{tpu_custom_call.1} parent=5 // pred_check_branch
        %121 = sbr.rel (%p119) target = $region40
      $region39: #{tpu_custom_call.1} parent=5 // pred_region
        %s122 = ssub.s32 %s9, 2
      $region40: #{tpu_custom_call.1} parent=5 // pred_fallthru
        _
    $region6: #{tpu_custom_call.1} parent=1 // loop_footer
      %s13 = sadd.s32 1, %s9
    $region7: #{tpu_custom_call.1} parent=1 // loop_footer_branch
      %8 = sbr.rel target = $region3
    $region8: #{tpu_custom_call.1} parent=1 // loop_exit
      _
    %123 = vsyncpa [#allocation3], 1
    %s124 = scalar_lea.sflag [#allocation3], 1
    %125 = vsyncpa %s124, 1
    %126 = vsyncpa [#allocation4], 1
    %s127 = scalar_lea.sflag [#allocation4], 1
    %128 = vsyncpa %s127, 1

// kernel: tpu_custom_call.1
$region0: #{tpu_custom_call.1}
  #allocation0 [shape = 'u32[]', space=smem, size = 0x4, offset = 0x4, fixed_abs, tag = 'smem constant byte address 0x4 - core index']
  #allocation1 [shape = 'u32[72,128]{1,0:T(1,128)}', space=vmem, size = 0x9000, scoped, tag = 'internal scratch']
  %s0 = inlined_call_operand.hbm [shape: f32[16,64], index: 0, kind: input, shape index: {}]
  %s1 = inlined_call_operand.hbm [shape: bf16[32,64], index: 1, kind: input, shape index: {}]
  %s2 = inlined_call_operand.vmem [shape: f32[1,64], index: 2, kind: input, shape index: {}]
  %s3 = inlined_call_operand.hbm [shape: bf16[32,64], index: 3, kind: input, shape index: {}]
  %s4 = inlined_call_operand.vmem [shape: f32[1,64], index: 4, kind: input, shape index: {}]
  %s5 = inlined_call_operand.hbm [shape: bf16[32,96], index: 5, kind: input, shape index: {}]
  %s6 = inlined_call_operand.vmem [shape: f32[1,32], index: 6, kind: input, shape index: {}]
  %s7 = inlined_call_operand.hbm [shape: bf16[32,96], index: 7, kind: input, shape index: {}]
  %s8 = inlined_call_operand.vmem [shape: f32[1,32], index: 8, kind: input, shape index: {}]
  %s9 = inlined_call_operand.vmem [shape: f32[1,64], index: 9, kind: input, shape index: {}]
  %s10 = inlined_call_operand.hbm [shape: f32[16,320], index: 10, kind: output, shape index: {}]
  %s11 = sld [smem:[#allocation0]]
  $region93: #{tpu_custom_call.1} parent=0
    _
  %s13 = ssub.s32 1, %s11
  %s14 = scalar_select 0, %s13, %s11
  $region1: #{tpu_custom_call.1} parent=0
    #allocation2 [shape = 'u8[8192]{0}', space=vmem, size = 0x2000, scoped, tag = 'input window, operand 0']
    #allocation3 [shape = 's32[2]{0}', space=sflag, size = 0x8, scoped, tag = 'scoped memory for tpu_custom_call.1']
    #allocation4 [shape = 's32[2]{0}', space=sflag, size = 0x8, scoped, tag = 'scoped memory for tpu_custom_call.1']
    #allocation5 [shape = 'u8[8192]{0}', space=vmem, size = 0x2000, scoped, tag = 'input window, operand 1, single buffered']
    #allocation6 [shape = 's32[1]{0}', space=sflag, size = 0x4, scoped, tag = 'scoped memory for tpu_custom_call.1']
    #allocation7 [shape = 'u8[8192]{0}', space=vmem, size = 0x2000, scoped, tag = 'input window, operand 3, single buffered']
    #allocation8 [shape = 'u8[8192]{0}', space=vmem, size = 0x2000, scoped, tag = 'input window, operand 5, single buffered']
    #allocation9 [shape = 's32[1]{0}', space=sflag, size = 0x4, scoped, tag = 'scoped memory for tpu_custom_call.1']
    #allocation10 [shape = 'u8[8192]{0}', space=vmem, size = 0x2000, scoped, tag = 'input window, operand 7, single buffered']
    #allocation11 [shape = 'u8[24576]{0}', space=vmem, size = 0x6000, scoped, tag = 'output window, operand 0']
    %15 = vsyncpa [#allocation3], 0
    %s16 = scalar_lea.sflag [#allocation3], 1
    %17 = vsyncpa %s16, 0
    %18 = vsyncpa [#allocation6], 0
    %19 = vsyncpa [#allocation9], 0
    %20 = vsyncpa [#allocation4], 0
    %s21 = scalar_lea.sflag [#allocation4], 1
    %22 = vsyncpa %s21, 0
    loop: start=0, step=1, limit=4
    $region2: #{tpu_custom_call.1} parent=1 // loop_pre_header
      _
    $region3: #{tpu_custom_call.1} parent=1 // loop_header
      %s24 = sphi 0, %s28
      %p25 = scmp.ge.s32.totalorder %s24, 4
      %s34 = sphi 0, %s36
      %s37 = sphi 0, %s34
      %s38 = sphi 0, %s37
      %s54 = sphi 0, %s38
      %s58 = sphi 0, %s58
      %s60 = sphi 0, %s58
      %s61 = sphi 0, %s60
      %s75 = sphi 0, %s61
      %s79 = sphi 0, %s79
      %s81 = sphi 0, %s79
      %s82 = sphi 0, %s81
      %s96 = sphi 0, %s82
      %s100 = sphi 0, %s100
      %s102 = sphi 0, %s100
      %s103 = sphi 0, %s102
      %s117 = sphi 0, %s103
      %s121 = sphi 0, %s121
      %s123 = sphi 0, %s121
      %s124 = sphi 0, %s123
      %s138 = sphi 0, %s124
      %s142 = sphi 0, %s142
      %s144 = sphi 0, %s142
      %s145 = sphi 0, %s144
      %s159 = sphi 0, %s145
      %s163 = sphi 0, %s163
      %s165 = sphi 0, %s163
      %s166 = sphi 0, %s165
      %s180 = sphi 0, %s166
      %s184 = sphi 0, %s184
      %s186 = sphi 0, %s184
      %s187 = sphi 0, %s186
      %s201 = sphi 0, %s187
      %s205 = sphi 0, %s205
      %s207 = sphi 0, %s205
      %s208 = sphi 0, %s207
      %s222 = sphi 0, %s208
      %s226 = sphi 0, %s226
      %s228 = sphi 0, %s226
      %s229 = sphi 0, %s228
      %s243 = sphi 0, %s229
      %s249 = sphi 0, %s251
      %s252 = sphi 0, %s249
      %s253 = sphi 0, %s252
      %s269 = sphi 0, %s253
    $region4: #{tpu_custom_call.1} parent=1 // loop_header_branch
      %27 = sbr.rel (%p25) target = $region8
    $region5: #{tpu_custom_call.1} parent=1 // loop_body
      %s29 = ssub.s32 %s24, 1
      %s30 = ssub.s32 %s24, 2
      %s31 = sadd.s32 %s24, 1
      %s32 = ssub.s32 %s24, %s31
      %p33 = scmp.eq.s32.totalorder %s32, 0
      %s35 = sadd.s32 %s34, 1
      %s36 = scalar_select %p33, %s34, %s35
      %p39 = pneg %p33
      %p40 = scmp.eq.s32.totalorder %s24, 1
      %p41 = por %p39, %p40
      %p42 = scmp.ne.s32.totalorder %s34, %s37
      %p43 = scmp.eq.s32.totalorder %s24, 0
      %p44 = por %p42, %p43
      %p45 = scmp.ne.s32.totalorder %s34, %s37
      %p46 = scmp.eq.s32.totalorder %s29, 1
      %p47 = por %p45, %p46
      %p48 = scmp.ne.s32.totalorder %s37, %s38
      %p49 = scmp.eq.s32.totalorder %s29, 0
      %p50 = por %p48, %p49
      %p51 = scmp.ne.s32.totalorder %s37, %s38
      %p52 = scmp.eq.s32.totalorder %s30, 1
      %p53 = por %p51, %p52
      %p55 = scmp.ne.s32.totalorder %s38, %s54
      %p56 = scmp.eq.s32.totalorder %s30, 0
      %p57 = por %p55, %p56
      %s59 = sadd.s32 %s58, 1
      %p62 = scmp.eq.s32.totalorder %s24, 1
      %p63 = scmp.ne.s32.totalorder %s58, %s60
      %p64 = scmp.eq.s32.totalorder %s24, 0
      %p65 = por %p63, %p64
      %p66 = scmp.ne.s32.totalorder %s58, %s60
      %p67 = scmp.eq.s32.totalorder %s29, 1
      %p68 = por %p66, %p67
      %p69 = scmp.ne.s32.totalorder %s60, %s61
      %p70 = scmp.eq.s32.totalorder %s29, 0
      %p71 = por %p69, %p70
      %p72 = scmp.ne.s32.totalorder %s60, %s61
      %p73 = scmp.eq.s32.totalorder %s30, 1
      %p74 = por %p72, %p73
      %p76 = scmp.ne.s32.totalorder %s61, %s75
      %p77 = scmp.eq.s32.totalorder %s30, 0
      %p78 = por %p76, %p77
      %s80 = sadd.s32 %s79, 1
      %p83 = scmp.eq.s32.totalorder %s24, 1
      %p84 = scmp.ne.s32.totalorder %s79, %s81
      %p85 = scmp.eq.s32.totalorder %s24, 0
      %p86 = por %p84, %p85
      %p87 = scmp.ne.s32.totalorder %s79, %s81
      %p88 = scmp.eq.s32.totalorder %s29, 1
      %p89 = por %p87, %p88
      %p90 = scmp.ne.s32.totalorder %s81, %s82
      %p91 = scmp.eq.s32.totalorder %s29, 0
      %p92 = por %p90, %p91
      %p93 = scmp.ne.s32.totalorder %s81, %s82
      %p94 = scmp.eq.s32.totalorder %s30, 1
      %p95 = por %p93, %p94
      %p97 = scmp.ne.s32.totalorder %s82, %s96
      %p98 = scmp.eq.s32.totalorder %s30, 0
      %p99 = por %p97, %p98
      %s101 = sadd.s32 %s100, 1
      %p104 = scmp.eq.s32.totalorder %s24, 1
      %p105 = scmp.ne.s32.totalorder %s100, %s102
      %p106 = scmp.eq.s32.totalorder %s24, 0
      %p107 = por %p105, %p106
      %p108 = scmp.ne.s32.totalorder %s100, %s102
      %p109 = scmp.eq.s32.totalorder %s29, 1
      %p110 = por %p108, %p109
      %p111 = scmp.ne.s32.totalorder %s102, %s103
      %p112 = scmp.eq.s32.totalorder %s29, 0
      %p113 = por %p111, %p112
      %p114 = scmp.ne.s32.totalorder %s102, %s103
      %p115 = scmp.eq.s32.totalorder %s30, 1
      %p116 = por %p114, %p115
      %p118 = scmp.ne.s32.totalorder %s103, %s117
      %p119 = scmp.eq.s32.totalorder %s30, 0
      %p120 = por %p118, %p119
      %s122 = sadd.s32 %s121, 1
      %p125 = scmp.eq.s32.totalorder %s24, 1
      %p126 = scmp.ne.s32.totalorder %s121, %s123
      %p127 = scmp.eq.s32.totalorder %s24, 0
      %p128 = por %p126, %p127
      %p129 = scmp.ne.s32.totalorder %s121, %s123
      %p130 = scmp.eq.s32.totalorder %s29, 1
      %p131 = por %p129, %p130
      %p132 = scmp.ne.s32.totalorder %s123, %s124
      %p133 = scmp.eq.s32.totalorder %s29, 0
      %p134 = por %p132, %p133
      %p135 = scmp.ne.s32.totalorder %s123, %s124
      %p136 = scmp.eq.s32.totalorder %s30, 1
      %p137 = por %p135, %p136
      %p139 = scmp.ne.s32.totalorder %s124, %s138
      %p140 = scmp.eq.s32.totalorder %s30, 0
      %p141 = por %p139, %p140
      %s143 = sadd.s32 %s142, 1
      %p146 = scmp.eq.s32.totalorder %s24, 1
      %p147 = scmp.ne.s32.totalorder %s142, %s144
      %p148 = scmp.eq.s32.totalorder %s24, 0
      %p149 = por %p147, %p148
      %p150 = scmp.ne.s32.totalorder %s142, %s144
      %p151 = scmp.eq.s32.totalorder %s29, 1
      %p152 = por %p150, %p151
      %p153 = scmp.ne.s32.totalorder %s144, %s145
      %p154 = scmp.eq.s32.totalorder %s29, 0
      %p155 = por %p153, %p154
      %p156 = scmp.ne.s32.totalorder %s144, %s145
      %p157 = scmp.eq.s32.totalorder %s30, 1
      %p158 = por %p156, %p157
      %p160 = scmp.ne.s32.totalorder %s145, %s159
      %p161 = scmp.eq.s32.totalorder %s30, 0
      %p162 = por %p160, %p161
      %s164 = sadd.s32 %s163, 1
      %p167 = scmp.eq.s32.totalorder %s24, 1
      %p168 = scmp.ne.s32.totalorder %s163, %s165
      %p169 = scmp.eq.s32.totalorder %s24, 0
      %p170 = por %p168, %p169
      %p171 = scmp.ne.s32.totalorder %s163, %s165
      %p172 = scmp.eq.s32.totalorder %s29, 1
      %p173 = por %p171, %p172
      %p174 = scmp.ne.s32.totalorder %s165, %s166
      %p175 = scmp.eq.s32.totalorder %s29, 0
      %p176 = por %p174, %p175
      %p177 = scmp.ne.s32.totalorder %s165, %s166
      %p178 = scmp.eq.s32.totalorder %s30, 1
      %p179 = por %p177, %p178
      %p181 = scmp.ne.s32.totalorder %s166, %s180
      %p182 = scmp.eq.s32.totalorder %s30, 0
      %p183 = por %p181, %p182
      %s185 = sadd.s32 %s184, 1
      %p188 = scmp.eq.s32.totalorder %s24, 1
      %p189 = scmp.ne.s32.totalorder %s184, %s186
      %p190 = scmp.eq.s32.totalorder %s24, 0
      %p191 = por %p189, %p190
      %p192 = scmp.ne.s32.totalorder %s184, %s186
      %p193 = scmp.eq.s32.totalorder %s29, 1
      %p194 = por %p192, %p193
      %p195 = scmp.ne.s32.totalorder %s186, %s187
      %p196 = scmp.eq.s32.totalorder %s29, 0
      %p197 = por %p195, %p196
      %p198 = scmp.ne.s32.totalorder %s186, %s187
      %p199 = scmp.eq.s32.totalorder %s30, 1
      %p200 = por %p198, %p199
      %p202 = scmp.ne.s32.totalorder %s187, %s201
      %p203 = scmp.eq.s32.totalorder %s30, 0
      %p204 = por %p202, %p203
      %s206 = sadd.s32 %s205, 1
      %p209 = scmp.eq.s32.totalorder %s24, 1
      %p210 = scmp.ne.s32.totalorder %s205, %s207
      %p211 = scmp.eq.s32.totalorder %s24, 0
      %p212 = por %p210, %p211
      %p213 = scmp.ne.s32.totalorder %s205, %s207
      %p214 = scmp.eq.s32.totalorder %s29, 1
      %p215 = por %p213, %p214
      %p216 = scmp.ne.s32.totalorder %s207, %s208
      %p217 = scmp.eq.s32.totalorder %s29, 0
      %p218 = por %p216, %p217
      %p219 = scmp.ne.s32.totalorder %s207, %s208
      %p220 = scmp.eq.s32.totalorder %s30, 1
      %p221 = por %p219, %p220
      %p223 = scmp.ne.s32.totalorder %s208, %s222
      %p224 = scmp.eq.s32.totalorder %s30, 0
      %p225 = por %p223, %p224
      %s227 = sadd.s32 %s226, 1
      %p230 = scmp.eq.s32.totalorder %s24, 1
      %p231 = scmp.ne.s32.totalorder %s226, %s228
      %p232 = scmp.eq.s32.totalorder %s24, 0
      %p233 = por %p231, %p232
      %p234 = scmp.ne.s32.totalorder %s226, %s228
      %p235 = scmp.eq.s32.totalorder %s29, 1
      %p236 = por %p234, %p235
      %p237 = scmp.ne.s32.totalorder %s228, %s229
      %p238 = scmp.eq.s32.totalorder %s29, 0
      %p239 = por %p237, %p238
      %p240 = scmp.ne.s32.totalorder %s228, %s229
      %p241 = scmp.eq.s32.totalorder %s30, 1
      %p242 = por %p240, %p241
      %p244 = scmp.ne.s32.totalorder %s229, %s243
      %p245 = scmp.eq.s32.totalorder %s30, 0
      %p246 = por %p244, %p245
      %s247 = ssub.s32 %s24, %s31
      %p248 = scmp.eq.s32.totalorder %s247, 0
      %s250 = sadd.s32 %s249, 1
      %s251 = scalar_select %p248, %s249, %s250
      %p254 = pneg %p248
      %p255 = scmp.eq.s32.totalorder %s24, 1
      %p256 = por %p254, %p255
      %p257 = scmp.ne.s32.totalorder %s249, %s252
      %p258 = scmp.eq.s32.totalorder %s24, 0
      %p259 = por %p257, %p258
      %p260 = scmp.ne.s32.totalorder %s249, %s252
      %p261 = scmp.eq.s32.totalorder %s29, 1
      %p262 = por %p260, %p261
      %p263 = scmp.ne.s32.totalorder %s252, %s253
      %p264 = scmp.eq.s32.totalorder %s29, 0
      %p265 = por %p263, %p264
      %p266 = scmp.ne.s32.totalorder %s252, %s253
      %p267 = scmp.eq.s32.totalorder %s30, 1
      %p268 = por %p266, %p267
      %p270 = scmp.ne.s32.totalorder %s253, %s269
      %p271 = scmp.eq.s32.totalorder %s30, 0
      %p272 = por %p270, %p271
      %p273 = scmp.le.s32.totalorder 1, %s24
      %p274 = scmp.lt.s32.totalorder %s24, 3
      %p275 = pnand %p273, %p274
      %p276 = pneg %p275
      // Predicated region
      $region9: #{tpu_custom_call.1} parent=5 // pred_check
        _
      $region10: #{tpu_custom_call.1} parent=5 // pred_check_branch
        %278 = sbr.rel (%p275) target = $region12
      $region11: #{tpu_custom_call.1} parent=5 // pred_region
        %s279 = ssub.s32 %s24, 1
        // Predicated region
        $region13: #{tpu_custom_call.1} parent=11 // pred_check
          %p280 = pneg %p71
        $region14: #{tpu_custom_call.1} parent=11 // pred_check_branch
          %282 = sbr.rel (%p280) target = $region16
        $region15: #{tpu_custom_call.1} parent=11 // pred_region
          %284 = vsyncadd [#allocation6], 0
          %s285 = sshll.u32 %s1, 4
          %s286 = int_to_ptr.hbm [resolvable:$true] %s285
          %s287 = sshll.u32 [#allocation5], 4
          %s288 = int_to_ptr.vmem [resolvable:$true] %s287
          %293 = dma.hbm_to_vmem [thread:$0]  %s286, 256, %s288, [#allocation6], 64, 64, 4
        $region16: #{tpu_custom_call.1} parent=11 // pred_fallthru
          _
        // Predicated region
        $region17: #{tpu_custom_call.1} parent=11 // pred_check
          %p294 = pneg %p92
        $region18: #{tpu_custom_call.1} parent=11 // pred_check_branch
          %296 = sbr.rel (%p294) target = $region20
        $region19: #{tpu_custom_call.1} parent=11 // pred_region
          _
        $region20: #{tpu_custom_call.1} parent=11 // pred_fallthru
          _
        // Predicated region
        $region21: #{tpu_custom_call.1} parent=11 // pred_check
          %p297 = pneg %p113
        $region22: #{tpu_custom_call.1} parent=11 // pred_check_branch
          %299 = sbr.rel (%p297) target = $region24
        $region23: #{tpu_custom_call.1} parent=11 // pred_region
          %301 = vsyncadd [#allocation6], 0
          %s302 = sshll.u32 %s3, 4
          %s303 = int_to_ptr.hbm [resolvable:$true] %s302
          %s304 = sshll.u32 [#allocation7], 4
          %s305 = int_to_ptr.vmem [resolvable:$true] %s304
          %310 = dma.hbm_to_vmem [thread:$0]  %s303, 256, %s305, [#allocation6], 64, 64, 4
        $region24: #{tpu_custom_call.1} parent=11 // pred_fallthru
          _
        // Predicated region
        $region25: #{tpu_custom_call.1} parent=11 // pred_check
          %p311 = pneg %p134
        $region26: #{tpu_custom_call.1} parent=11 // pred_check_branch
          %313 = sbr.rel (%p311) target = $region28
        $region27: #{tpu_custom_call.1} parent=11 // pred_region
          _
        $region28: #{tpu_custom_call.1} parent=11 // pred_fallthru
          _
        // Predicated region
        $region29: #{tpu_custom_call.1} parent=11 // pred_check
          %p314 = pneg %p155
        $region30: #{tpu_custom_call.1} parent=11 // pred_check_branch
          %316 = sbr.rel (%p314) target = $region32
        $region31: #{tpu_custom_call.1} parent=11 // pred_region
          %318 = vsyncadd [#allocation9], 0
          %s319 = sshll.u32 %s5, 4
          %s320 = int_to_ptr.hbm [resolvable:$true] %s319
          %s321 = sshll.u32 [#allocation8], 4
          %s322 = int_to_ptr.vmem [resolvable:$true] %s321
          %327 = dma.hbm_to_vmem [thread:$0]  %s320, 256, %s322, [#allocation9], 64, 64, 4
        $region32: #{tpu_custom_call.1} parent=11 // pred_fallthru
          _
        // Predicated region
        $region33: #{tpu_custom_call.1} parent=11 // pred_check
          %p328 = pneg %p176
        $region34: #{tpu_custom_call.1} parent=11 // pred_check_branch
          %330 = sbr.rel (%p328) target = $region36
        $region35: #{tpu_custom_call.1} parent=11 // pred_region
          _
        $region36: #{tpu_custom_call.1} parent=11 // pred_fallthru
          _
        // Predicated region
        $region37: #{tpu_custom_call.1} parent=11 // pred_check
          %p331 = pneg %p197
        $region38: #{tpu_custom_call.1} parent=11 // pred_check_branch
          %333 = sbr.rel (%p331) target = $region40
        $region39: #{tpu_custom_call.1} parent=11 // pred_region
          %335 = vsyncadd [#allocation9], 0
          %s336 = sshll.u32 %s7, 4
          %s337 = int_to_ptr.hbm [resolvable:$true] %s336
          %s338 = sshll.u32 [#allocation10], 4
          %s339 = int_to_ptr.vmem [resolvable:$true] %s338
          %344 = dma.hbm_to_vmem [thread:$0]  %s337, 256, %s339, [#allocation9], 64, 64, 4
        $region40: #{tpu_custom_call.1} parent=11 // pred_fallthru
          _
        // Predicated region
        $region41: #{tpu_custom_call.1} parent=11 // pred_check
          %p345 = pneg %p218
        $region42: #{tpu_custom_call.1} parent=11 // pred_check_branch
          %347 = sbr.rel (%p345) target = $region44
        $region43: #{tpu_custom_call.1} parent=11 // pred_region
          _
        $region44: #{tpu_custom_call.1} parent=11 // pred_fallthru
          _
        // Predicated region
        $region45: #{tpu_custom_call.1} parent=11 // pred_check
          %p348 = pneg %p239
        $region46: #{tpu_custom_call.1} parent=11 // pred_check_branch
          %350 = sbr.rel (%p348) target = $region48
        $region47: #{tpu_custom_call.1} parent=11 // pred_region
          _
        $region48: #{tpu_custom_call.1} parent=11 // pred_fallthru
          _
      $region12: #{tpu_custom_call.1} parent=5 // pred_fallthru
        _
      %p351 = scmp.lt.s32.totalorder %s24, 2
      // Predicated region
      $region49: #{tpu_custom_call.1} parent=5 // pred_check
        %p352 = pneg %p351
      $region50: #{tpu_custom_call.1} parent=5 // pred_check_branch
        %354 = sbr.rel (%p352) target = $region52
      $region51: #{tpu_custom_call.1} parent=5 // pred_region
        // Predicated region
        $region53: #{tpu_custom_call.1} parent=51 // pred_check
          %p355 = pneg %p44
        $region54: #{tpu_custom_call.1} parent=51 // pred_check_branch
          %357 = sbr.rel (%p355) target = $region56
        $region55: #{tpu_custom_call.1} parent=51 // pred_region
          %s358 = sand.u32 %s34, 1
          %s359 = scalar_lea.sflag [#allocation3], %s358
          %s360 = sand.u32 %s34, 1
          %s361 = smul.addr %s360, 8
          %s362 = scalar_lea.vmem [#allocation2], %s361
          %364 = vsyncadd %s359, 0
          %s365 = smul.addr %s24, 8
          %s366 = scalar_lea.hbm %s0, %s365
          %s368 = sshll.u32 %s366, 4
          %s369 = int_to_ptr.hbm [resolvable:$true] %s368
          %s370 = sshll.u32 %s362, 4
          %s371 = int_to_ptr.vmem [resolvable:$true] %s370
          %373 = dma.hbm_to_vmem [thread:$0]  %s369, 128, %s371, %s359
        $region56: #{tpu_custom_call.1} parent=51 // pred_fallthru
          _
      $region52: #{tpu_custom_call.1} parent=5 // pred_fallthru
        _
      %p374 = scmp.le.s32.totalorder 1, %s24
      %p375 = scmp.lt.s32.totalorder %s24, 3
      %p376 = pnand %p374, %p375
      %p377 = pneg %p376
      // Predicated region
      $region57: #{tpu_custom_call.1} parent=5 // pred_check
        _
      $region58: #{tpu_custom_call.1} parent=5 // pred_check_branch
        %379 = sbr.rel (%p376) target = $region60
      $region59: #{tpu_custom_call.1} parent=5 // pred_region
        %s380 = ssub.s32 %s24, 1
        %s381 = sand.u32 %s37, 1
        %s382 = scalar_lea.sflag [#allocation3], %s381
        %s383 = sand.u32 %s37, 1
        %s384 = smul.addr %s383, 8
        %s385 = scalar_lea.vmem [#allocation2], %s384
        // Predicated region
        $region61: #{tpu_custom_call.1} parent=59 // pred_check
          %p386 = pneg %p50
        $region62: #{tpu_custom_call.1} parent=59 // pred_check_branch
          %388 = sbr.rel (%p386) target = $region64
        $region63: #{tpu_custom_call.1} parent=59 // pred_region
          %390 = dma.done %s382, 128
        $region64: #{tpu_custom_call.1} parent=59 // pred_fallthru
          _
        // Predicated region
        $region65: #{tpu_custom_call.1} parent=59 // pred_check
          %p391 = pneg %p71
        $region66: #{tpu_custom_call.1} parent=59 // pred_check_branch
          %393 = sbr.rel (%p391) target = $region68
        $region67: #{tpu_custom_call.1} parent=59 // pred_region
          %395 = dma.done [#allocation6], 256
        $region68: #{tpu_custom_call.1} parent=59 // pred_fallthru
          _
        // Predicated region
        $region69: #{tpu_custom_call.1} parent=59 // pred_check
          %p396 = pneg %p113
        $region70: #{tpu_custom_call.1} parent=59 // pred_check_branch
          %398 = sbr.rel (%p396) target = $region72
        $region71: #{tpu_custom_call.1} parent=59 // pred_region
          %400 = dma.done [#allocation6], 256
        $region72: #{tpu_custom_call.1} parent=59 // pred_fallthru
          _
        // Predicated region
        $region73: #{tpu_custom_call.1} parent=59 // pred_check
          %p401 = pneg %p155
        $region74: #{tpu_custom_call.1} parent=59 // pred_check_branch
          %403 = sbr.rel (%p401) target = $region76
        $region75: #{tpu_custom_call.1} parent=59 // pred_region
          %405 = dma.done [#allocation9], 256
        $region76: #{tpu_custom_call.1} parent=59 // pred_fallthru
          _
        // Predicated region
        $region77: #{tpu_custom_call.1} parent=59 // pred_check
          %p406 = pneg %p197
        $region78: #{tpu_custom_call.1} parent=59 // pred_check_branch
          %408 = sbr.rel (%p406) target = $region80
        $region79: #{tpu_custom_call.1} parent=59 // pred_region
          %410 = dma.done [#allocation9], 256
        $region80: #{tpu_custom_call.1} parent=59 // pred_fallthru
          _
        %s411 = sand.u32 %s37, 1
        %s412 = scalar_lea.sflag [#allocation3], %s411
        %s413 = sand.u32 %s37, 1
        %s414 = smul.addr %s413, 8
        %s415 = scalar_lea.vmem [#allocation2], %s414
        %p416 = pneg %p50
        %p417 = pneg %p47
        %p418 = pneg %p71
        %p419 = pneg %p68
        %p420 = pneg %p92
        %p421 = pneg %p89
        %p422 = pneg %p113
        %p423 = pneg %p110
        %p424 = pneg %p134
        %p425 = pneg %p131
        %p426 = pneg %p155
        %p427 = pneg %p152
        %p428 = pneg %p176
        %p429 = pneg %p173
        %p430 = pneg %p197
        %p431 = pneg %p194
        %p432 = pneg %p218
        %p433 = pneg %p215
        %p434 = pneg %p239
        %p435 = pneg %p236
        %p436 = pneg %p265
        %p437 = pneg %p262
        %s438 = sand.u32 %s252, 1
        %s439 = scalar_lea.sflag [#allocation4], %s438
        %s440 = sand.u32 %s252, 1
        %s441 = smul.addr %s440, 24
        %s442 = scalar_lea.vmem [#allocation11], %s441
        %v444 = vld [vmem:[%s385] sm:$0xff]
        %v445 = vpack.c.bf16 %v444, %v444
        %v446 = vld [vmem:[#allocation5] sm:$0xf]
        %v447 = vld [vmem:[#allocation5 + $0x4] sm:$0xf]
        %v448 = vld [vmem:[#allocation5 + $0x8] sm:$0xf]
        %v449 = vld [vmem:[#allocation5 + $0xc] sm:$0xf]
        %v450 = vld [vmem:[%s2] sm:$0x1]
        %v452 = vperm.slane %v450, 0
        %v458 = vunpack.c.l.b16 %v446
        %v459 = vunpack.c.l.b16 %v447
        %v460 = vunpack.c.l.b16 %v448
        %v461 = vunpack.c.l.b16 %v449
        %v462 = vpack.c.b16 %v459, %v458
        %v463 = vpack.c.b16 %v461, %v460
        %vm466 = vcmask 261120
        %v468 = vsel %vm466, %v445, 0
        %470 = vmatpush.bf16.msra.mxu0 0
        %471 = vmatpush.bf16.msra.mxu0 0
        %472 = vmatpush.bf16.msra.mxu0 0
        %473 = vmatpush.bf16.msra.mxu0 0
        %474 = vmatpush.bf16.msra.mxu0 0
        %475 = vmatpush.bf16.msra.mxu0 0
        %476 = vmatpush.bf16.msra.mxu0 %v463
        %477 = vmatpush.bf16.msra.mxu0 %v462
        %478 = vmatmul.bf16.gmra.mxu0 %v468
        %v479 = vpop.f32.mrf.mxu0
        %v480 = vadd.f32 %v452, %v479
        %v481 = vpop.f32.mrf.mxu0
        %482 = vdwg.mxu0
        %v483 = vld [vmem:[#allocation7] sm:$0xf]
        %v484 = vld [vmem:[#allocation7 + $0x4] sm:$0xf]
        %v485 = vld [vmem:[#allocation7 + $0x8] sm:$0xf]
        %v486 = vld [vmem:[#allocation7 + $0xc] sm:$0xf]
        %v487 = vld [vmem:[%s4] sm:$0x1]
        %v489 = vperm.slane %v487, 0
        %492 = vrot.lane.b32.xlu0 %v445, 96
        %v493 = vpop.permute.xlu0 %492
        %v498 = vunpack.c.l.b16 %v483
        %v499 = vunpack.c.l.b16 %v484
        %v500 = vunpack.c.l.b16 %v485
        %v501 = vunpack.c.l.b16 %v486
        %v502 = vpack.c.b16 %v499, %v498
        %v503 = vpack.c.b16 %v501, %v500
        %v507 = vsel %vm466, %v493, 0
        %509 = vmatpush.bf16.msra.mxu0 0
        %510 = vmatpush.bf16.msra.mxu0 0
        %511 = vmatpush.bf16.msra.mxu0 0
        %512 = vmatpush.bf16.msra.mxu0 0
        %513 = vmatpush.bf16.msra.mxu0 0
        %514 = vmatpush.bf16.msra.mxu0 0
        %515 = vmatpush.bf16.msra.mxu0 %v503
        %516 = vmatpush.bf16.msra.mxu0 %v502
        %517 = vmatmul.bf16.gmra.mxu0 %v507
        %v518 = vpop.f32.mrf.mxu0
        %v519 = vadd.f32 %v489, %v518
        %v520 = vpop.f32.mrf.mxu0
        %521 = vdwg.mxu0
        %v522 = vtanh.pop %v480
        %v523 = vtanh.pop %v519
        %v524 = vpack.c.bf16 %v522, %v522
        %v525 = vld [vmem:[#allocation8] sm:$0xf]
        %v526 = vld [vmem:[#allocation8 + $0x4] sm:$0xf]
        %v527 = vld [vmem:[#allocation8 + $0x8] sm:$0xf]
        %v528 = vld [vmem:[#allocation8 + $0xc] sm:$0xf]
        %v533 = vunpack.c.l.b16 %v525
        %v534 = vunpack.c.l.b16 %v526
        %v535 = vunpack.c.l.b16 %v527
        %v536 = vunpack.c.l.b16 %v528
        %v537 = vpack.c.b16 %v534, %v533
        %v538 = vpack.c.b16 %v536, %v535
        %v542 = vsel %vm466, %v524, 0
        %544 = vmatpush.bf16.msra.mxu0 0
        %545 = vmatpush.bf16.msra.mxu0 0
        %546 = vmatpush.bf16.msra.mxu0 0
        %547 = vmatpush.bf16.msra.mxu0 0
        %548 = vmatpush.bf16.msra.mxu0 0
        %549 = vmatpush.bf16.msra.mxu0 0
        %550 = vmatpush.bf16.msra.mxu0 %v538
        %551 = vmatpush.bf16.msra.mxu0 %v537
        %552 = vmatmul.bf16.gmra.mxu0 %v542
        %v553 = vpop.f32.mrf.mxu0
        %v554 = vadd.f32 0.0, %v553
        %v555 = vpop.f32.mrf.mxu0
        %556 = vdwg.mxu0
        %v557 = vpack.c.bf16 %v523, %v523
        %v558 = vld [vmem:[#allocation10] sm:$0xf]
        %v559 = vld [vmem:[#allocation10 + $0x4] sm:$0xf]
        %v560 = vld [vmem:[#allocation10 + $0x8] sm:$0xf]
        %v561 = vld [vmem:[#allocation10 + $0xc] sm:$0xf]
        %v566 = vunpack.c.l.b16 %v558
        %v567 = vunpack.c.l.b16 %v559
        %v568 = vunpack.c.l.b16 %v560
        %v569 = vunpack.c.l.b16 %v561
        %v570 = vpack.c.b16 %v567, %v566
        %v571 = vpack.c.b16 %v569, %v568
        %v575 = vsel %vm466, %v557, 0
        %577 = vmatpush.bf16.msra.mxu0 0
        %578 = vmatpush.bf16.msra.mxu0 0
        %579 = vmatpush.bf16.msra.mxu0 0
        %580 = vmatpush.bf16.msra.mxu0 0
        %581 = vmatpush.bf16.msra.mxu0 0
        %582 = vmatpush.bf16.msra.mxu0 0
        %583 = vmatpush.bf16.msra.mxu0 %v571
        %584 = vmatpush.bf16.msra.mxu0 %v570
        %585 = vmatmul.bf16.gmra.mxu0 %v575
        %v586 = vpop.f32.mrf.mxu0
        %v587 = vadd.f32 0.0, %v586
        %v588 = vpop.f32.mrf.mxu0
        %589 = vdwg.mxu0
        %v590 = vld [vmem:[%s6] sm:$0x1]
        %v592 = vperm.slane %v590, 0
        %v594 = vadd.f32 %v554, %v592
        %v595 = vld [vmem:[%s8] sm:$0x1]
        %v597 = vperm.slane %v595, 0
        %v599 = vadd.f32 %v587, %v597
        %v600 = vadd.f32 %v554, %v587
        %v601 = vld [vmem:[%s9] sm:$0x1]
        %v603 = vperm.slane %v601, 0
        %604 = vrot.lane.b32.xlu0 %v603, 32
        %v605 = vpop.permute.xlu0 %604
        %v607 = vadd.f32 %v600, %v605
        %609 = vrot.lane.b32.xlu0 %v607, 96
        %v610 = vpop.permute.xlu0 %609
        %613 = vrot.lane.b32.xlu0 %v522, 64
        %v614 = vpop.permute.xlu0 %613
        %617 = vrot.lane.b32.xlu0 %v523, 96
        %v618 = vpop.permute.xlu0 %617
        %621 = vrot.lane.b32.xlu0 %v599, 32
        %v622 = vpop.permute.xlu0 %621
        %625 = vrot.lane.b32.xlu0 %v480, 64
        %v626 = vpop.permute.xlu0 %625
        %vm628 = vcmask 523264
        %v629 = vsel %vm628, %v610, %v614
        %vm630 = vcmask 785408
        %v631 = vsel %vm630, %v629, %v618
        %v632 = vsel %vm466, %v594, %v622
        %v633 = vsel %vm628, %v632, %v626
        %634 = vst [vmem:[%s442] sm:$0xff] %v631
        %635 = vst [vmem:[%s442 + $0x8] sm:$0xff] %v633
        %636 = vst.msk [vmem:[%s442 + $0x10] sm:$0xff] %vm628, %v519
        %s637 = sand.u32 %s252, 1
        %s638 = scalar_lea.sflag [#allocation4], %s637
        %s639 = sand.u32 %s252, 1
        %s640 = smul.addr %s639, 24
        %s641 = scalar_lea.vmem [#allocation11], %s640
        // Predicated region
        $region81: #{tpu_custom_call.1} parent=59 // pred_check
          %p642 = pneg %p262
        $region82: #{tpu_custom_call.1} parent=59 // pred_check_branch
          %644 = sbr.rel (%p642) target = $region84
        $region83: #{tpu_custom_call.1} parent=59 // pred_region
          %646 = vsyncadd %s638, 0
          %s647 = smul.addr %s29, 3
          %s648 = smul.addr %s647, 8
          %s649 = scalar_lea.hbm %s10, %s648
          %s651 = sshll.u32 %s641, 4
          %s652 = int_to_ptr.vmem [resolvable:$true] %s651
          %s653 = sshll.u32 %s649, 4
          %s654 = int_to_ptr.hbm [resolvable:$true] %s653
          %656 = dma.vmem_to_hbm [thread:$0]  %s652, 384, %s654, %s638
        $region84: #{tpu_custom_call.1} parent=59 // pred_fallthru
          _
      $region60: #{tpu_custom_call.1} parent=5 // pred_fallthru
        _
      %p657 = scmp.le.s32.totalorder 2, %s24
      // Predicated region
      $region85: #{tpu_custom_call.1} parent=5 // pred_check
        %p658 = pneg %p657
      $region86: #{tpu_custom_call.1} parent=5 // pred_check_branch
        %660 = sbr.rel (%p658) target = $region88
      $region87: #{tpu_custom_call.1} parent=5 // pred_region
        %s661 = ssub.s32 %s24, 2
        // Predicated region
        $region89: #{tpu_custom_call.1} parent=87 // pred_check
          %p662 = pneg %p268
        $region90: #{tpu_custom_call.1} parent=87 // pred_check_branch
          %664 = sbr.rel (%p662) target = $region92
        $region91: #{tpu_custom_call.1} parent=87 // pred_region
          %s665 = sand.u32 %s253, 1
          %s666 = scalar_lea.sflag [#allocation4], %s665
          %s667 = sand.u32 %s253, 1
          %s668 = smul.addr %s667, 24
          %s669 = scalar_lea.vmem [#allocation11], %s668
          %671 = dma.done %s666, 384
        $region92: #{tpu_custom_call.1} parent=87 // pred_fallthru
          _
      $region88: #{tpu_custom_call.1} parent=5 // pred_fallthru
        _
    $region6: #{tpu_custom_call.1} parent=1 // loop_footer
      %s28 = sadd.s32 1, %s24
    $region7: #{tpu_custom_call.1} parent=1 // loop_footer_branch
      %23 = sbr.rel target = $region3
    $region8: #{tpu_custom_call.1} parent=1 // loop_exit
      _
    %672 = vsyncpa [#allocation3], 1
    %s673 = scalar_lea.sflag [#allocation3], 1
    %674 = vsyncpa %s673, 1
    %675 = vsyncpa [#allocation6], 1
    %676 = vsyncpa [#allocation9], 1
    %677 = vsyncpa [#allocation4], 1
    %s678 = scalar_lea.sflag [#allocation4], 1
    %679 = vsyncpa %s678, 1

</llo_original>
